<compile_context>
chip_gen: v7x
topology: tpu7x:2x2x1
jax: 0.10.0
libtpu: 0.0.40
codegen_flags: <defaults>
</compile_context>

<pallas_src>
import math
import functools

import jax
import jax.numpy as jnp
from jax import lax
from jax.experimental import pallas as pl
from jax.experimental.pallas import tpu as pltpu

# Explicit VMEM budget, safe on v5e/v6e (128 MiB) and v7x (64 MiB).
_VMEM_LIMIT = 48 * 1024 * 1024


def _pick_row_tile(n, preferred):
    """Largest multiple-of-8 tile <= preferred that divides n; else the full extent."""
    t = min(preferred, n)
    t -= t % 8
    while t >= 8:
        if n % t == 0:
            return t
        t -= 8
    return n  # full extent: block == full array dim is always legal


# ----------------------------------------------------------------------------
# Row-tiled projection: out[n, m-tile, :] = x[n, m-tile, :] @ w[n, :, :]
# ----------------------------------------------------------------------------
def _proj_kernel(x_ref, w_ref, o_ref):
    # x_ref: [TM, D], w_ref: [D, N]  (leading stacked axis squeezed away)
    o_ref[...] = jnp.dot(x_ref[...], w_ref[...],
                         preferred_element_type=jnp.float32).astype(o_ref.dtype)


def _projection(x_stack, w_stack, tm=256):
    """x_stack: [NX, M, D], w_stack: [NX, D, N] -> [NX, M, N]."""
    NX, M, D = x_stack.shape
    _, _, N = w_stack.shape
    tm = _pick_row_tile(M, tm)
    grid = (NX, M // tm)
    return pl.pallas_call(
        _proj_kernel,
        out_shape=jax.ShapeDtypeStruct((NX, M, N), x_stack.dtype),
        grid_spec=pltpu.PrefetchScalarGridSpec(
            num_scalar_prefetch=0,
            grid=grid,
            in_specs=[
                pl.BlockSpec((None, tm, D), lambda n, m: (n, m, 0)),
                pl.BlockSpec((None, D, N), lambda n, m: (n, 0, 0)),
            ],
            out_specs=pl.BlockSpec((None, tm, N), lambda n, m: (n, m, 0)),
        ),
        compiler_params=pltpu.CompilerParams(
            dimension_semantics=("parallel", "parallel"),
            vmem_limit_bytes=_VMEM_LIMIT),
    )(x_stack, w_stack)


# ----------------------------------------------------------------------------
# Flash-style attention over [B*H, S, d_k] with online softmax.
# ----------------------------------------------------------------------------
def _flash_kernel(q_ref, k_ref, v_ref, o_ref, m_sc, l_sc, acc_sc, *, scale):
    ki = pl.program_id(2)

    @pl.when(ki == 0)
    def _():
        m_sc[...] = jnp.full_like(m_sc, -jnp.inf)
        l_sc[...] = jnp.zeros_like(l_sc)
        acc_sc[...] = jnp.zeros_like(acc_sc)

    q = q_ref[...]                      # [TQ, d_k]
    k = k_ref[...]                      # [TK, d_k]
    v = v_ref[...]                      # [TK, d_k]

    # Fold 1/sqrt(d_k) into q (touches S*d_k elements, not S*S).
    qs = q * scale
    # QK^T in NT form: contract last dims of both operands, no explicit .T.
    s = lax.dot_general(qs, k, (((1,), (1,)), ((), ())),
                        preferred_element_type=jnp.float32)   # [TQ, TK], f32

    m_prev = m_sc[...]
    m_new = jnp.maximum(m_prev, jnp.max(s, axis=-1, keepdims=True))
    alpha = jnp.exp(m_prev - m_new)
    p = jnp.exp(s - m_new)
    l_sc[...] = alpha * l_sc[...] + jnp.sum(p, axis=-1, keepdims=True)
    acc_sc[...] = alpha * acc_sc[...] + jnp.dot(
        p.astype(v.dtype), v, preferred_element_type=jnp.float32)
    m_sc[...] = m_new

    @pl.when(ki == pl.num_programs(2) - 1)
    def _():
        inv_l = pl.reciprocal(l_sc[...], approx=True)      # EUP, frees VALU slots
        o_ref[...] = (acc_sc[...] * inv_l).astype(o_ref.dtype)


def _flash_attention(qh, kh, vh, d_k, tq=128, tk=128):
    """qh/kh/vh: [B*H, S, d_k] -> [B*H, S, d_k]."""
    BH, S, DK = qh.shape
    tq = _pick_row_tile(S, tq)
    tk = _pick_row_tile(S, tk)
    kernel = functools.partial(_flash_kernel, scale=1.0 / math.sqrt(d_k))
    return pl.pallas_call(
        kernel,
        out_shape=jax.ShapeDtypeStruct((BH, S, DK), qh.dtype),
        grid_spec=pltpu.PrefetchScalarGridSpec(
            num_scalar_prefetch=0,
            grid=(BH, S // tq, S // tk),
            in_specs=[
                pl.BlockSpec((None, tq, DK), lambda b, qi, ki: (b, qi, 0)),
                pl.BlockSpec((None, tk, DK), lambda b, qi, ki: (b, ki, 0)),
                pl.BlockSpec((None, tk, DK), lambda b, qi, ki: (b, ki, 0)),
            ],
            out_specs=pl.BlockSpec((None, tq, DK), lambda b, qi, ki: (b, qi, 0)),
            scratch_shapes=[
                pltpu.VMEM((tq, 1), jnp.float32),    # running max
                pltpu.VMEM((tq, 1), jnp.float32),    # running denom
                pltpu.VMEM((tq, DK), jnp.float32),   # running numerator
            ],
        ),
        compiler_params=pltpu.CompilerParams(
            dimension_semantics=("parallel", "parallel", "arbitrary"),
            vmem_limit_bytes=_VMEM_LIMIT),
    )(qh, kh, vh)


# ----------------------------------------------------------------------------
# Full forward pass.
# ----------------------------------------------------------------------------
def multi_head_attention(q, k, v, wq_t, wk_t, wv_t, wo_t, num_heads):
    """q,k,v: [B,S,D]; w*_t: [D_in, D_out] (already transposed from nn.Linear)."""
    B, S, D = q.shape
    assert D % num_heads == 0
    d_k = D // num_heads
    M = B * S

    # Fused Q/K/V projections: one pipelined matmul grid over stacked inputs.
    x_stack = jnp.stack([q.reshape(M, D), k.reshape(M, D), v.reshape(M, D)])  # [3,M,D]
    w_stack = jnp.stack([wq_t, wk_t, wv_t])                                   # [3,D,D]
    qkv = _projection(x_stack, w_stack)                                        # [3,M,D]

    # Split heads: [3, B, S, H, d_k] -> [3, B, H, S, d_k] -> [3, B*H, S, d_k]
    qkv = qkv.reshape(3, B, S, num_heads, d_k).transpose(0, 1, 3, 2, 4)
    qkv = qkv.reshape(3, B * num_heads, S, d_k)
    qh, kh, vh = qkv[0], qkv[1], qkv[2]

    attn = _flash_attention(qh, kh, vh, d_k)                                   # [B*H,S,d_k]

    # Concat heads: [B, H, S, d_k] -> [B, S, H*d_k] = [M, D]
    attn = attn.reshape(B, num_heads, S, d_k).transpose(0, 2, 1, 3).reshape(M, D)

    # Output projection reuses the same row-tiled matmul kernel.
    out = _projection(attn[None], wo_t[None])[0]                               # [M, D]
    return out.reshape(B, S, D)


# ----------------------------------------------------------------------------
# Pure-JAX reference mirroring the PyTorch forward (eval mode).
# ----------------------------------------------------------------------------
def mha_reference(q, k, v, wq_t, wk_t, wv_t, wo_t, num_heads):
    B, S, D = q.shape
    d_k = D // num_heads

    def proj(x, w):
        y = jnp.einsum('bsd,de->bse', x, w)
        return y.reshape(B, S, num_heads, d_k).transpose(0, 2, 1, 3)

    qh, kh, vh = proj(q, wq_t), proj(k, wk_t), proj(v, wv_t)
    scores = jnp.einsum('bhqd,bhkd->bhqk', qh, kh) / math.sqrt(d_k)
    p = jax.nn.softmax(scores, axis=-1)
    out = jnp.einsum('bhqk,bhkd->bhqd', p, vh)
    out = out.transpose(0, 2, 1, 3).reshape(B, S, D)
    return jnp.einsum('bsd,de->bse', out, wo_t)


if __name__ == "__main__":
    B, S, D, H = 2, 8, 32, 4          # batch, seq, d_model, num_heads
    key = jax.random.PRNGKey(0)
    kq, kk, kv, k1, k2, k3, k4 = jax.random.split(key, 7)

    q = jax.random.normal(kq, (B, S, D), dtype=jnp.float32)
    k = jax.random.normal(kk, (B, S, D), dtype=jnp.float32)
    v = jax.random.normal(kv, (B, S, D), dtype=jnp.float32)

    # nn.Linear(D, D, bias=False) default init: U(-1/sqrt(D), 1/sqrt(D)).
    bound = 1.0 / math.sqrt(D)

    def init_w(rng):
        w = jax.random.uniform(rng, (D, D), jnp.float32, -bound, bound)  # (out, in)
        return w.T                                                       # (in, out)

    wq_t, wk_t, wv_t, wo_t = init_w(k1), init_w(k2), init_w(k3), init_w(k4)

    out = multi_head_attention(q, k, v, wq_t, wk_t, wv_t, wo_t, H)
    out = jax.block_until_ready(out)

    ref = mha_reference(q, k, v, wq_t, wk_t, wv_t, wo_t, H)
    assert out.shape == (B, S, D)
    # Tolerance covers the EUP approximate reciprocal in the softmax denom.
    assert jnp.allclose(out, ref, atol=5e-3, rtol=5e-3), "mismatch vs reference"

    print("KERNEL_OK")
</pallas_src>

<mosaic_0001>
module attributes {stable_mosaic.version = 11 : i64} {
  func.func @_proj_kernel(%arg0: i32, %arg1: i32, %arg2: memref<1x16x32xf32, #tpu.memory_space<vmem>>, %arg3: memref<1x32x32xf32, #tpu.memory_space<vmem>>, %arg4: memref<1x16x32xf32, #tpu.memory_space<vmem>>) attributes {dimension_semantics = [#tpu.dimension_semantics<parallel>, #tpu.dimension_semantics<parallel>], iteration_bounds = array<i64: 3, 1>, scalar_prefetch = 0 : i64, scratch_operands = 0 : i64, tpu.core_type = #tpu.core_type<tc>, window_params = [{transform_indices = @transform_0, window_bounds = array<i64: 1, 16, 32>}, {transform_indices = @transform_1, window_bounds = array<i64: 1, 32, 32>}, {transform_indices = @transform_2, window_bounds = array<i64: 1, 16, 32>}]} {
    %c0 = arith.constant 0 : index
    %c0_0 = arith.constant 0 : index
    %c0_1 = arith.constant 0 : index
    %0 = vector.load %arg2[%c0, %c0_0, %c0_1] : memref<1x16x32xf32, #tpu.memory_space<vmem>>, vector<1x16x32xf32>
    %1 = vector.shape_cast %0 : vector<1x16x32xf32> to vector<16x32xf32>
    %c0_2 = arith.constant 0 : index
    %c0_3 = arith.constant 0 : index
    %c0_4 = arith.constant 0 : index
    %2 = vector.load %arg3[%c0_2, %c0_3, %c0_4] : memref<1x32x32xf32, #tpu.memory_space<vmem>>, vector<1x32x32xf32>
    %3 = vector.shape_cast %2 : vector<1x32x32xf32> to vector<32x32xf32>
    %cst = arith.constant dense<0.000000e+00> : vector<16x32xf32>
    %4 = tpu.matmul %1, %3, %cst {dimension_numbers = #tpu.dot_dimension_numbers<[1], [0], [0], [1], [0, 0, 1, 1], [], []>} : vector<16x32xf32>, vector<32x32xf32>, vector<16x32xf32> -> vector<16x32xf32>
    %c0_5 = arith.constant 0 : index
    %c0_6 = arith.constant 0 : index
    %c0_7 = arith.constant 0 : index
    %5 = vector.load %arg4[%c0_5, %c0_6, %c0_7] : memref<1x16x32xf32, #tpu.memory_space<vmem>>, vector<1x16x32xf32>
    %6 = vector.shape_cast %5 : vector<1x16x32xf32> to vector<16x32xf32>
    %7 = vector.shape_cast %4 : vector<16x32xf32> to vector<1x16x32xf32>
    tpu.vector_store %arg4[%c0_5, %c0_6, %c0_7], %7 {strides = array<i32>} : memref<1x16x32xf32, #tpu.memory_space<vmem>>, vector<1x16x32xf32>,
    return
  }
  func.func @transform_0(%arg0: i32, %arg1: i32) -> (i32, i32, i32) {
    %c0_i32 = arith.constant 0 : i32
    %c0_i32_0 = arith.constant 0 : i32
    return %arg0, %arg1, %c0_i32 : i32, i32, i32
  }
  func.func @transform_1(%arg0: i32, %arg1: i32) -> (i32, i32, i32) {
    %c0_i32 = arith.constant 0 : i32
    %c0_i32_0 = arith.constant 0 : i32
    %c0_i32_1 = arith.constant 0 : i32
    return %arg0, %c0_i32, %c0_i32_0 : i32, i32, i32
  }
  func.func @transform_2(%arg0: i32, %arg1: i32) -> (i32, i32, i32) {
    %c0_i32 = arith.constant 0 : i32
    %c0_i32_0 = arith.constant 0 : i32
    return %arg0, %arg1, %c0_i32 : i32, i32, i32
  }
}

</mosaic_0001>

<llo_original>
// kernel: tpu_custom_call.1
$region0: #{tpu_custom_call.1}
  #allocation0 [shape = 'u32[]', space=smem, size = 0x4, offset = 0x4, fixed_abs, tag = 'smem constant byte address 0x4 - core index']
  #allocation1 [shape = 'u32[144,128]{1,0:T(1,128)}', space=vmem, size = 0x12000, scoped, tag = 'internal scratch']
  %s0 = inlined_call_operand.hbm [shape: f32[3,16,32], index: 0, kind: input, shape index: {}]
  %s1 = inlined_call_operand.hbm [shape: f32[3,32,32], index: 1, kind: input, shape index: {}]
  %s2 = inlined_call_operand.hbm [shape: f32[3,16,32], index: 2, kind: output, shape index: {}]
  %s3 = sld [smem:[#allocation0]]
  $region49: #{tpu_custom_call.1} parent=0
    _
  %s5 = ssub.s32 1, %s3
  %s6 = scalar_select 0, %s5, %s3
  $region1: #{tpu_custom_call.1} parent=0
    #allocation2 [shape = 'u8[16384]{0}', space=vmem, size = 0x4000, scoped, tag = 'input window, operand 0']
    #allocation3 [shape = 's32[2]{0}', space=sflag, size = 0x8, scoped, tag = 'scoped memory for tpu_custom_call.1']
    #allocation4 [shape = 's32[2]{0}', space=sflag, size = 0x8, scoped, tag = 'scoped memory for tpu_custom_call.1']
    #allocation5 [shape = 'u8[32768]{0}', space=vmem, size = 0x8000, scoped, tag = 'input window, operand 1']
    #allocation6 [shape = 's32[2]{0}', space=sflag, size = 0x8, scoped, tag = 'scoped memory for tpu_custom_call.1']
    #allocation7 [shape = 'u8[16384]{0}', space=vmem, size = 0x4000, scoped, tag = 'output window, operand 0']
    %7 = vsyncpa [#allocation3], 0
    %s8 = scalar_lea.sflag [#allocation3], 1
    %9 = vsyncpa %s8, 0
    %10 = vsyncpa [#allocation6], 0
    %s11 = scalar_lea.sflag [#allocation6], 1
    %12 = vsyncpa %s11, 0
    %13 = vsyncpa [#allocation4], 0
    %s14 = scalar_lea.sflag [#allocation4], 1
    %15 = vsyncpa %s14, 0
    loop: start=0, step=1, limit=5
    $region2: #{tpu_custom_call.1} parent=1 // loop_pre_header
      _
    $region3: #{tpu_custom_call.1} parent=1 // loop_header
      %s17 = sphi 0, %s21
      %p18 = scmp.ge.s32.totalorder %s17, 5
      %s24 = sphi 0, %s36
      %s25 = sphi 0, %s32
      %s26 = sphi 0, %s24
      %s27 = sphi 0, %s25
      %s28 = sphi 0, %s26
      %s29 = sphi 0, %s27
      %s41 = sphi 0, %s43
      %s44 = sphi 0, %s41
      %s45 = sphi 0, %s44
      %s61 = sphi 0, %s45
      %s67 = sphi 0, %s69
      %s70 = sphi 0, %s67
      %s71 = sphi 0, %s70
      %s87 = sphi 0, %s71
      %s95 = sphi 0, %s97
      %s98 = sphi 0, %s95
      %s99 = sphi 0, %s98
      %s115 = sphi 0, %s99
    $region4: #{tpu_custom_call.1} parent=1 // loop_header_branch
      %20 = sbr.rel (%p18) target = $region8
    $region5: #{tpu_custom_call.1} parent=1 // loop_body
      %s22 = ssub.s32 %s17, 1
      %s23 = ssub.s32 %s17, 2
      %s30 = sadd.s32 1, %s25
      %p31 = scmp.ge.s32.totalorder %s30, 1
      %s32 = scalar_select %p31, 0, %s30
      %s33 = sadd.s32 1, %s24
      %s34 = scalar_select %p31, %s33, %s24
      %p35 = scmp.ge.s32.totalorder %s34, 3
      %s36 = scalar_select %p35, 0, %s34
      %s37 = ssub.s32 %s24, %s36
      %s38 = ssub.s32 %s25, %s32
      %s39 = sor.u32 %s37, %s38
      %p40 = scmp.eq.s32.totalorder %s39, 0
      %s42 = sadd.s32 %s41, 1
      %s43 = scalar_select %p40, %s41, %s42
      %p46 = pneg %p40
      %p47 = scmp.eq.s32.totalorder %s17, 2
      %p48 = por %p46, %p47
      %p49 = scmp.ne.s32.totalorder %s41, %s44
      %p50 = scmp.eq.s32.totalorder %s17, 0
      %p51 = por %p49, %p50
      %p52 = scmp.ne.s32.totalorder %s41, %s44
      %p53 = scmp.eq.s32.totalorder %s22, 2
      %p54 = por %p52, %p53
      %p55 = scmp.ne.s32.totalorder %s44, %s45
      %p56 = scmp.eq.s32.totalorder %s22, 0
      %p57 = por %p55, %p56
      %p58 = scmp.ne.s32.totalorder %s44, %s45
      %p59 = scmp.eq.s32.totalorder %s23, 2
      %p60 = por %p58, %p59
      %p62 = scmp.ne.s32.totalorder %s45, %s61
      %p63 = scmp.eq.s32.totalorder %s23, 0
      %p64 = por %p62, %p63
      %s65 = ssub.s32 %s24, %s36
      %p66 = scmp.eq.s32.totalorder %s65, 0
      %s68 = sadd.s32 %s67, 1
      %s69 = scalar_select %p66, %s67, %s68
      %p72 = pneg %p66
      %p73 = scmp.eq.s32.totalorder %s17, 2
      %p74 = por %p72, %p73
      %p75 = scmp.ne.s32.totalorder %s67, %s70
      %p76 = scmp.eq.s32.totalorder %s17, 0
      %p77 = por %p75, %p76
      %p78 = scmp.ne.s32.totalorder %s67, %s70
      %p79 = scmp.eq.s32.totalorder %s22, 2
      %p80 = por %p78, %p79
      %p81 = scmp.ne.s32.totalorder %s70, %s71
      %p82 = scmp.eq.s32.totalorder %s22, 0
      %p83 = por %p81, %p82
      %p84 = scmp.ne.s32.totalorder %s70, %s71
      %p85 = scmp.eq.s32.totalorder %s23, 2
      %p86 = por %p84, %p85
      %p88 = scmp.ne.s32.totalorder %s71, %s87
      %p89 = scmp.eq.s32.totalorder %s23, 0
      %p90 = por %p88, %p89
      %s91 = ssub.s32 %s24, %s36
      %s92 = ssub.s32 %s25, %s32
      %s93 = sor.u32 %s91, %s92
      %p94 = scmp.eq.s32.totalorder %s93, 0
      %s96 = sadd.s32 %s95, 1
      %s97 = scalar_select %p94, %s95, %s96
      %p100 = pneg %p94
      %p101 = scmp.eq.s32.totalorder %s17, 2
      %p102 = por %p100, %p101
      %p103 = scmp.ne.s32.totalorder %s95, %s98
      %p104 = scmp.eq.s32.totalorder %s17, 0
      %p105 = por %p103, %p104
      %p106 = scmp.ne.s32.totalorder %s95, %s98
      %p107 = scmp.eq.s32.totalorder %s22, 2
      %p108 = por %p106, %p107
      %p109 = scmp.ne.s32.totalorder %s98, %s99
      %p110 = scmp.eq.s32.totalorder %s22, 0
      %p111 = por %p109, %p110
      %p112 = scmp.ne.s32.totalorder %s98, %s99
      %p113 = scmp.eq.s32.totalorder %s23, 2
      %p114 = por %p112, %p113
      %p116 = scmp.ne.s32.totalorder %s99, %s115
      %p117 = scmp.eq.s32.totalorder %s23, 0
      %p118 = por %p116, %p117
      %p119 = scmp.le.s32.totalorder 1, %s17
      %p120 = scmp.lt.s32.totalorder %s17, 4
      %p121 = pnand %p119, %p120
      %p122 = pneg %p121
      // Predicated region
      $region9: #{tpu_custom_call.1} parent=5 // pred_check
        _
      $region10: #{tpu_custom_call.1} parent=5 // pred_check_branch
        %124 = sbr.rel (%p121) target = $region12
      $region11: #{tpu_custom_call.1} parent=5 // pred_region
        %s125 = ssub.s32 %s17, 1
      $region12: #{tpu_custom_call.1} parent=5 // pred_fallthru
        _
      %p126 = scmp.lt.s32.totalorder %s17, 3
      // Predicated region
      $region13: #{tpu_custom_call.1} parent=5 // pred_check
        %p127 = pneg %p126
      $region14: #{tpu_custom_call.1} parent=5 // pred_check_branch
        %129 = sbr.rel (%p127) target = $region16
      $region15: #{tpu_custom_call.1} parent=5 // pred_region
        // Predicated region
        $region17: #{tpu_custom_call.1} parent=15 // pred_check
          %p130 = pneg %p51
        $region18: #{tpu_custom_call.1} parent=15 // pred_check_branch
          %132 = sbr.rel (%p130) target = $region20
        $region19: #{tpu_custom_call.1} parent=15 // pred_region
          %s133 = sand.u32 %s41, 1
          %s134 = scalar_lea.sflag [#allocation3], %s133
          %s135 = sand.u32 %s41, 1
          %s136 = smul.addr %s135, 16
          %s137 = scalar_lea.vmem [#allocation2], %s136
          %s138 = smul.u32 2, %s25
          %s140 = ssub.s32 256, 256
          %141 = vsyncadd %s134, %s140
          %s142 = smul.addr %s24, 2
          %s143 = sadd.s32 %s138, %s142
          %s144 = smul.addr %s143, 128
          %s145 = scalar_lea.hbm %s0, %s144
          %s146 = sshll.u32 %s137, 4
          %s147 = int_to_ptr.vmem [resolvable:$true] %s146
          %152 = dma.hbm_to_vmem [thread:$0]  %s145, 256, %s147, %s134, 128, 128, 8
        $region20: #{tpu_custom_call.1} parent=15 // pred_fallthru
          _
        // Predicated region
        $region21: #{tpu_custom_call.1} parent=15 // pred_check
          %p153 = pneg %p77
        $region22: #{tpu_custom_call.1} parent=15 // pred_check_branch
          %155 = sbr.rel (%p153) target = $region24
        $region23: #{tpu_custom_call.1} parent=15 // pred_region
          %s156 = sand.u32 %s67, 1
          %s157 = scalar_lea.sflag [#allocation6], %s156
          %s158 = sand.u32 %s67, 1
          %s159 = smul.addr %s158, 32
          %s160 = scalar_lea.vmem [#allocation5], %s159
          %s162 = ssub.s32 512, 512
          %163 = vsyncadd %s157, %s162
          %s164 = smul.addr %s24, 4
          %s165 = smul.addr %s164, 128
          %s166 = scalar_lea.hbm %s1, %s165
          %s167 = sshll.u32 %s160, 4
          %s168 = int_to_ptr.vmem [resolvable:$true] %s167
          %173 = dma.hbm_to_vmem [thread:$0]  %s166, 512, %s168, %s157, 128, 128, 8
        $region24: #{tpu_custom_call.1} parent=15 // pred_fallthru
          _
      $region16: #{tpu_custom_call.1} parent=5 // pred_fallthru
        _
      %p174 = scmp.le.s32.totalorder 1, %s17
      %p175 = scmp.lt.s32.totalorder %s17, 4
      %p176 = pnand %p174, %p175
      %p177 = pneg %p176
      // Predicated region
      $region25: #{tpu_custom_call.1} parent=5 // pred_check
        _
      $region26: #{tpu_custom_call.1} parent=5 // pred_check_branch
        %179 = sbr.rel (%p176) target = $region28
      $region27: #{tpu_custom_call.1} parent=5 // pred_region
        %s180 = ssub.s32 %s17, 1
        %s181 = sand.u32 %s44, 1
        %s182 = scalar_lea.sflag [#allocation3], %s181
        %s183 = sand.u32 %s44, 1
        %s184 = smul.addr %s183, 16
        %s185 = scalar_lea.vmem [#allocation2], %s184
        // Predicated region
        $region29: #{tpu_custom_call.1} parent=27 // pred_check
          %p186 = pneg %p57
        $region30: #{tpu_custom_call.1} parent=27 // pred_check_branch
          %188 = sbr.rel (%p186) target = $region32
        $region31: #{tpu_custom_call.1} parent=27 // pred_region
          %189 = dma.done %s182, 256
        $region32: #{tpu_custom_call.1} parent=27 // pred_fallthru
          _
        %s190 = sand.u32 %s70, 1
        %s191 = scalar_lea.sflag [#allocation6], %s190
        %s192 = sand.u32 %s70, 1
        %s193 = smul.addr %s192, 32
        %s194 = scalar_lea.vmem [#allocation5], %s193
        // Predicated region
        $region33: #{tpu_custom_call.1} parent=27 // pred_check
          %p195 = pneg %p83
        $region34: #{tpu_custom_call.1} parent=27 // pred_check_branch
          %197 = sbr.rel (%p195) target = $region36
        $region35: #{tpu_custom_call.1} parent=27 // pred_region
          %198 = dma.done %s191, 512
        $region36: #{tpu_custom_call.1} parent=27 // pred_fallthru
          _
        %s199 = sand.u32 %s44, 1
        %s200 = scalar_lea.sflag [#allocation3], %s199
        %s201 = sand.u32 %s44, 1
        %s202 = smul.addr %s201, 16
        %s203 = scalar_lea.vmem [#allocation2], %s202
        %p204 = pneg %p57
        %p205 = pneg %p54
        %s206 = sand.u32 %s70, 1
        %s207 = scalar_lea.sflag [#allocation6], %s206
        %s208 = sand.u32 %s70, 1
        %s209 = smul.addr %s208, 32
        %s210 = scalar_lea.vmem [#allocation5], %s209
        %p211 = pneg %p83
        %p212 = pneg %p80
        %p213 = pneg %p111
        %p214 = pneg %p108
        %s215 = sand.u32 %s98, 1
        %s216 = scalar_lea.sflag [#allocation4], %s215
        %s217 = sand.u32 %s98, 1
        %s218 = smul.addr %s217, 16
        %s219 = scalar_lea.vmem [#allocation7], %s218
        %s220 = smul.u32 2, %s27
        %s221 = smul.u32 2, %s27
        %v222 = vld [vmem:[%s185] sm:$0xff]
        %v223 = vld [vmem:[%s185 + $0x8] sm:$0xff]
        %v224 = vld [vmem:[%s194] sm:$0xff]
        %v225 = vld [vmem:[%s194 + $0x8] sm:$0xff]
        %v226 = vld [vmem:[%s194 + $0x10] sm:$0xff]
        %v227 = vld [vmem:[%s194 + $0x18] sm:$0xff]
        %vm228 = vcmask 261120
        %v230 = vsel %vm228, %v222, 0
        %v233 = vsel %vm228, %v223, 0
        %235 = vmatprep.subr.mxu0 0.0
        %236 = vmatpush1.msra.mxu0 %v224
        %237 = vmatprep.subr.mxu0 0.0
        %238 = vmatpush1.msra.mxu0 %v225
        %239 = vmatprep.subr.mxu0 0.0
        %240 = vmatpush1.msra.mxu0 %v226
        %241 = vmatprep.subr.mxu0 0.0
        %242 = vmatpush1.msra.mxu0 %v227
        %243 = vmatprep.subr.mxu0 0.0
        %244 = vmatpush1.msra.mxu0 0.0
        %245 = vmatprep.subr.mxu0 0.0
        %246 = vmatpush1.msra.mxu0 0.0
        %247 = vmatprep.subr.mxu0 0.0
        %248 = vmatpush1.msra.mxu0 0.0
        %249 = vmatprep.subr.mxu0 0.0
        %250 = vmatpush1.msra.mxu0 0.0
        %251 = vmatprep.subr.mxu0 0.0
        %252 = vmatpush1.msra.mxu0 0.0
        %253 = vmatprep.subr.mxu0 0.0
        %254 = vmatpush1.msra.mxu0 0.0
        %255 = vmatprep.subr.mxu0 0.0
        %256 = vmatpush1.msra.mxu0 0.0
        %257 = vmatprep.subr.mxu0 0.0
        %258 = vmatpush1.msra.mxu0 0.0
        %259 = vmatprep.subr.mxu0 0.0
        %260 = vmatpush1.msra.mxu0 0.0
        %261 = vmatprep.subr.mxu0 0.0
        %262 = vmatpush1.msra.mxu0 0.0
        %263 = vmatprep.subr.mxu0 0.0
        %264 = vmatpush1.msra.mxu0 0.0
        %265 = vmatprep.subr.mxu0 0.0
        %266 = vmatpush1.msra.mxu0 0.0
        %267 = vmatprep.subr.mxu0 0.0
        %268 = vmatpush1.msra.mxu0 0.0
        %269 = vmatprep.subr.mxu0 0.0
        %270 = vmatpush1.msra.mxu0 0.0
        %271 = vmatprep.subr.mxu0 0.0
        %272 = vmatpush1.msra.mxu0 0.0
        %273 = vmatprep.subr.mxu0 0.0
        %274 = vmatpush1.msra.mxu0 0.0
        %275 = vmatprep.subr.mxu0 0.0
        %276 = vmatpush1.msra.mxu0 0.0
        %277 = vmatprep.subr.mxu0 0.0
        %278 = vmatpush1.msra.mxu0 0.0
        %279 = vmatprep.subr.mxu0 0.0
        %280 = vmatpush1.msra.mxu0 0.0
        %281 = vmatprep.subr.mxu0 0.0
        %282 = vmatpush1.msra.mxu0 0.0
        %283 = vmatprep.subr.mxu0 0.0
        %284 = vmatpush1.msra.mxu0 0.0
        %285 = vmatprep.subr.mxu0 0.0
        %286 = vmatpush1.msra.mxu0 0.0
        %287 = vmatprep.subr.mxu0 0.0
        %288 = vmatpush1.msra.mxu0 0.0
        %289 = vmatprep.subr.mxu0 0.0
        %290 = vmatpush1.msra.mxu0 0.0
        %291 = vmatprep.subr.mxu0 0.0
        %292 = vmatpush1.msra.mxu0 0.0
        %293 = vmatprep.subr.mxu0 0.0
        %294 = vmatpush1.msra.mxu0 0.0
        %295 = vmatprep.subr.mxu0 0.0
        %296 = vmatpush1.msra.mxu0 0.0
        %297 = vmatprep.subr.mxu0 0.0
        %298 = vmatpush1.msra.mxu0 0.0
        %299 = vmatprep.mubr.f32.mxu0 0.0
        %300 = vmatmul.mubr.f32.gmra.mrb[0].mxu0 %v230
        %v301 = vpop.f32.mrb[0].mxu0
        %v302 = vadd.f32 0.0, %v301
        %v303 = vpop.f32.mrb[0].mxu0
        %304 = vmatprep.mubr.f32.mxu0 0.0
        %305 = vmatmul.mubr.f32.gmra.mrb[0].mxu0 %v233
        %v306 = vpop.f32.mrb[0].mxu0
        %v307 = vadd.f32 0.0, %v306
        %v308 = vpop.f32.mrb[0].mxu0
        %309 = vdwg.mxu0
        %310 = vst.msk [vmem:[%s219] sm:$0xff] %vm228, %v302
        %311 = vst.msk [vmem:[%s219 + $0x8] sm:$0xff] %vm228, %v307
        %s312 = sand.u32 %s98, 1
        %s313 = scalar_lea.sflag [#allocation4], %s312
        %s314 = sand.u32 %s98, 1
        %s315 = smul.addr %s314, 16
        %s316 = scalar_lea.vmem [#allocation7], %s315
        // Predicated region
        $region37: #{tpu_custom_call.1} parent=27 // pred_check
          %p317 = pneg %p108
        $region38: #{tpu_custom_call.1} parent=27 // pred_check_branch
          %319 = sbr.rel (%p317) target = $region40
        $region39: #{tpu_custom_call.1} parent=27 // pred_region
          %s320 = smul.u32 2, %s27
          %s322 = ssub.s32 256, 256
          %323 = vsyncadd %s313, %s322
          %s324 = smul.addr %s26, 2
          %s325 = sadd.s32 %s320, %s324
          %s326 = smul.addr %s325, 128
          %s327 = scalar_lea.hbm %s2, %s326
          %s328 = sshll.u32 %s316, 4
          %s329 = int_to_ptr.vmem [resolvable:$true] %s328
          %334 = dma.vmem_to_hbm [thread:$0]  %s329, 256, %s327, %s313, 128, 128, 8
        $region40: #{tpu_custom_call.1} parent=27 // pred_fallthru
          _
      $region28: #{tpu_custom_call.1} parent=5 // pred_fallthru
        _
      %p335 = scmp.le.s32.totalorder 2, %s17
      // Predicated region
      $region41: #{tpu_custom_call.1} parent=5 // pred_check
        %p336 = pneg %p335
      $region42: #{tpu_custom_call.1} parent=5 // pred_check_branch
        %338 = sbr.rel (%p336) target = $region44
      $region43: #{tpu_custom_call.1} parent=5 // pred_region
        %s339 = ssub.s32 %s17, 2
        // Predicated region
        $region45: #{tpu_custom_call.1} parent=43 // pred_check
          %p340 = pneg %p114
        $region46: #{tpu_custom_call.1} parent=43 // pred_check_branch
          %342 = sbr.rel (%p340) target = $region48
        $region47: #{tpu_custom_call.1} parent=43 // pred_region
          %s343 = sand.u32 %s99, 1
          %s344 = scalar_lea.sflag [#allocation4], %s343
          %s345 = sand.u32 %s99, 1
          %s346 = smul.addr %s345, 16
          %s347 = scalar_lea.vmem [#allocation7], %s346
          %348 = dma.done %s344, 256
        $region48: #{tpu_custom_call.1} parent=43 // pred_fallthru
          _
      $region44: #{tpu_custom_call.1} parent=5 // pred_fallthru
        _
    $region6: #{tpu_custom_call.1} parent=1 // loop_footer
      %s21 = sadd.s32 1, %s17
    $region7: #{tpu_custom_call.1} parent=1 // loop_footer_branch
      %16 = sbr.rel target = $region3
    $region8: #{tpu_custom_call.1} parent=1 // loop_exit
      _
    %349 = vsyncpa [#allocation3], 1
    %s350 = scalar_lea.sflag [#allocation3], 1
    %351 = vsyncpa %s350, 1
    %352 = vsyncpa [#allocation6], 1
    %s353 = scalar_lea.sflag [#allocation6], 1
    %354 = vsyncpa %s353, 1
    %355 = vsyncpa [#allocation4], 1
    %s356 = scalar_lea.sflag [#allocation4], 1
    %357 = vsyncpa %s356, 1

</llo_original>
